<compile_context>
chip_gen: v7x
topology: tpu7x:2x2x1
jax: 0.10.0
libtpu: 0.0.40
codegen_flags: <defaults>
</compile_context>

<pallas_src>
import itertools
import numpy as np
import jax
import jax.numpy as jnp
from jax.experimental import pallas as pl
from jax.experimental.pallas import tpu as pltpu


def _anfis_kernel(x_ref, pq_ref, plin_ref, pc_ref, c_ref, y_ref):
    # x:  (TB, V)      input batch tile
    # pq: (V, R)       quadratic-term coefficients   (resident across grid)
    # pl: (V, R)       linear-term coefficients      (resident)
    # pc: (1, R)       constant term                 (resident)
    # c:  (R, J*O)     j-major flattened consequent coefficients (resident)
    # y:  (TB, O)
    x = x_ref[...]
    V = x.shape[1]
    O = y_ref.shape[1]

    # --- fuzzification + antecedent layer: two tiny MXU matmuls + one exp ---
    s = (jnp.dot(x * x, pq_ref[...], preferred_element_type=jnp.float32)
         + jnp.dot(x, plin_ref[...], preferred_element_type=jnp.float32)
         + pc_ref[...])                                             # (TB, R)
    rules = jnp.exp(-s)

    # --- L1 normalization of rule weights (F.normalize(p=1, dim=1)) ---
    denom = jnp.maximum(jnp.sum(jnp.abs(rules), axis=1, keepdims=True), 1e-12)
    w = rules * pl.reciprocal(denom, approx=False)

    # --- fused TSK consequent: t[b, j*O+o] = sum_r w[b,r] * coeff[r,o,j] ---
    t = jnp.dot(w, c_ref[...], preferred_element_type=jnp.float32)  # (TB, J*O)

    # y[b,o] = sum_j xp[b,j] * t[b, j*O+o];  xp = [x, 1]  (j=V is the bias)
    y = t[:, V * O:(V + 1) * O]
    for j in range(V):
        y = y + x[:, j:j + 1] * t[:, j * O:(j + 1) * O]
    y_ref[...] = y                                                  # one dense store


def _pick_tb(B, block_b):
    """Pick batch tile: large (amortize grid overhead) but >=2 grid steps when
    possible so both v7x TensorCores are used; multiple of 8 for layout."""
    if B < 16:
        return B                                   # single full-dim block
    half = ((-(-B // 2)) + 7) // 8 * 8             # round_up(ceil(B/2), 8)
    return max(8, min(block_b, half))


def anfis_forward(x, mu, sigma, coeff, mf_indices, *, block_b=1024):
    """x: (B, V); mu/sigma: (V, M); coeff: (R, O, V+1); mf_indices: (R, V) int."""
    x = x.astype(jnp.float32)
    B, V = x.shape
    R, O, J = coeff.shape

    # --- host-side static precomputation (pure parameter reshuffling) ---
    mf_idx = np.asarray(mf_indices)                                 # (R, V) static
    var_idx = np.arange(V)[None, :]                                 # (1, V)
    mu_sel = mu[var_idx, mf_idx]                                    # (R, V)
    sig_sel = sigma[var_idx, mf_idx]                                # (R, V)
    inv2s2 = 1.0 / (2.0 * sig_sel * sig_sel)
    Pq = inv2s2.T.astype(jnp.float32)                               # (V, R) x^2 coeff
    Pl = (-mu_sel / (sig_sel * sig_sel)).T.astype(jnp.float32)      # (V, R) x coeff
    pc = jnp.sum(mu_sel * mu_sel * inv2s2, axis=1)[None, :].astype(jnp.float32)  # (1, R)

    # j-major consequent flattening: C[r, j*O + o] = coeff[r, o, j]
    C = jnp.transpose(coeff, (0, 2, 1)).reshape(R, J * O).astype(jnp.float32)

    # --- batch tiling ---
    TB = _pick_tb(B, block_b)
    Bp = -(-B // TB) * TB
    if Bp != B:
        x = jnp.pad(x, ((0, Bp - B), (0, 0)))       # padded rows sliced off below

    y = pl.pallas_call(
        _anfis_kernel,
        out_shape=jax.ShapeDtypeStruct((Bp, O), jnp.float32),
        grid=(Bp // TB,),
        in_specs=[
            pl.BlockSpec((TB, V), lambda i: (i, 0)),        # x, batch-tiled
            pl.BlockSpec((V, R), lambda i: (0, 0)),         # Pq, resident
            pl.BlockSpec((V, R), lambda i: (0, 0)),         # Pl, resident
            pl.BlockSpec((1, R), lambda i: (0, 0)),         # pc, resident
            pl.BlockSpec((R, J * O), lambda i: (0, 0)),     # C, resident
        ],
        out_specs=pl.BlockSpec((TB, O), lambda i: (i, 0)),
        compiler_params=pltpu.CompilerParams(
            dimension_semantics=("parallel",)),
    )(x, Pq, Pl, pc, C)

    return y[:B]


def anfis_reference(x, mu, sigma, coeff, mf_indices):
    """Pure numpy reference following the PyTorch forward exactly."""
    x = np.asarray(x); mu = np.asarray(mu); sigma = np.asarray(sigma)
    coeff = np.asarray(coeff); mf_indices = np.asarray(mf_indices)
    B, V = x.shape
    fz = np.exp(-((x[:, :, None] - mu[None]) ** 2) / (2.0 * sigma[None] ** 2))  # (B,V,M)
    ants = fz[np.arange(B)[:, None, None],
              np.arange(V)[None, None, :],
              mf_indices[None]]                                                 # (B,R,V)
    rules = np.prod(ants, axis=2)                                               # (B,R)
    w = rules / np.maximum(np.abs(rules).sum(axis=1, keepdims=True), 1e-12)
    xp = np.concatenate([x, np.ones((B, 1), dtype=x.dtype)], axis=1)            # (B,V+1)
    tsk = np.einsum('roj,bj->bor', coeff, xp)                                   # (B,O,R)
    return np.einsum('bor,br->bo', tsk, w)                                      # (B,O)


if __name__ == "__main__":
    # ANFIS configuration: 4 input variables, 3 gaussian MFs each,
    # num_rules = 3**4 = 81, 2 output variables, batch = 64.
    # With block_b=1024 the 2-TC-aware tile picker gives TB=32 -> grid=(2,).
    B, V, M, O = 64, 4, 3, 2
    mf_indices = np.array(list(itertools.product(range(M), repeat=V)), dtype=np.int32)
    R = mf_indices.shape[0]

    key = jax.random.PRNGKey(0)
    kx, kmu, ksig, kco = jax.random.split(key, 4)
    x = jax.random.normal(kx, (B, V), dtype=jnp.float32)
    mu = jax.random.uniform(kmu, (V, M), dtype=jnp.float32, minval=-1.0, maxval=1.0)
    sigma = jax.random.uniform(ksig, (V, M), dtype=jnp.float32, minval=0.5, maxval=1.5)
    # The PyTorch module initializes coeff to zeros; use small deterministic
    # random values so the kernel output is non-trivial.
    coeff = 0.1 * jax.random.normal(kco, (R, O, V + 1), dtype=jnp.float32)

    y = anfis_forward(x, mu, sigma, coeff, mf_indices)
    y = jax.block_until_ready(y)

    y_ref = anfis_reference(x, mu, sigma, coeff, mf_indices)
    # rtol slightly relaxed vs 1e-5: the fused exp-of-sum reorders the FP
    # accumulation relative to the product-of-exps reference.
    np.testing.assert_allclose(np.asarray(y), y_ref, rtol=1e-4, atol=1e-5)
    print("KERNEL_OK")
</pallas_src>

<mosaic_0001>
module attributes {stable_mosaic.version = 11 : i64} {
  func.func @_anfis_kernel(%arg0: i32, %arg1: memref<32x4xf32, #tpu.memory_space<vmem>>, %arg2: memref<4x81xf32, #tpu.memory_space<vmem>>, %arg3: memref<4x81xf32, #tpu.memory_space<vmem>>, %arg4: memref<1x81xf32, #tpu.memory_space<vmem>>, %arg5: memref<81x10xf32, #tpu.memory_space<vmem>>, %arg6: memref<32x2xf32, #tpu.memory_space<vmem>>) attributes {dimension_semantics = [#tpu.dimension_semantics<parallel>], iteration_bounds = array<i64: 2>, scalar_prefetch = 0 : i64, scratch_operands = 0 : i64, tpu.core_type = #tpu.core_type<tc>, window_params = [{transform_indices = @transform_0, window_bounds = array<i64: 32, 4>}, {pipeline_mode = #tpu.pipeline_mode<synchronous>, transform_indices = @transform_1, window_bounds = array<i64: 4, 81>}, {pipeline_mode = #tpu.pipeline_mode<synchronous>, transform_indices = @transform_2, window_bounds = array<i64: 4, 81>}, {pipeline_mode = #tpu.pipeline_mode<synchronous>, transform_indices = @transform_3, window_bounds = array<i64: 1, 81>}, {pipeline_mode = #tpu.pipeline_mode<synchronous>, transform_indices = @transform_4, window_bounds = array<i64: 81, 10>}, {transform_indices = @transform_5, window_bounds = array<i64: 32, 2>}]} {
    %c0 = arith.constant 0 : index
    %c0_0 = arith.constant 0 : index
    %0 = vector.load %arg1[%c0, %c0_0] : memref<32x4xf32, #tpu.memory_space<vmem>>, vector<32x4xf32>
    %1 = arith.mulf %0, %0 : vector<32x4xf32>
    %c0_1 = arith.constant 0 : index
    %c0_2 = arith.constant 0 : index
    %2 = vector.load %arg2[%c0_1, %c0_2] : memref<4x81xf32, #tpu.memory_space<vmem>>, vector<4x81xf32>
    %cst = arith.constant dense<0.000000e+00> : vector<32x81xf32>
    %3 = tpu.matmul %1, %2, %cst {dimension_numbers = #tpu.dot_dimension_numbers<[1], [0], [0], [1], [0, 0, 1, 1], [], []>} : vector<32x4xf32>, vector<4x81xf32>, vector<32x81xf32> -> vector<32x81xf32>
    %c0_3 = arith.constant 0 : index
    %c0_4 = arith.constant 0 : index
    %4 = vector.load %arg3[%c0_3, %c0_4] : memref<4x81xf32, #tpu.memory_space<vmem>>, vector<4x81xf32>
    %cst_5 = arith.constant dense<0.000000e+00> : vector<32x81xf32>
    %5 = tpu.matmul %0, %4, %cst_5 {dimension_numbers = #tpu.dot_dimension_numbers<[1], [0], [0], [1], [0, 0, 1, 1], [], []>} : vector<32x4xf32>, vector<4x81xf32>, vector<32x81xf32> -> vector<32x81xf32>
    %6 = arith.addf %3, %5 : vector<32x81xf32>
    %c0_6 = arith.constant 0 : index
    %c0_7 = arith.constant 0 : index
    %7 = vector.load %arg4[%c0_6, %c0_7] : memref<1x81xf32, #tpu.memory_space<vmem>>, vector<1x81xf32>
    %8 = vector.broadcast %7 : vector<1x81xf32> to vector<32x81xf32>
    %9 = arith.addf %6, %8 : vector<32x81xf32>
    %cst_8 = arith.constant 0.000000e+00 : f32
    %10 = vector.broadcast %cst_8 : f32 to vector<32x81xf32>
    %11 = arith.subf %10, %9 : vector<32x81xf32>
    %12 = math.exp %11 : vector<32x81xf32>
    %13 = math.absf %12 : vector<32x81xf32>
    %cst_9 = arith.constant dense<0.000000e+00> : vector<32xf32>
    %14 = vector.multi_reduction <add>, %13, %cst_9 [1] : vector<32x81xf32> to vector<32xf32>
    %15 = vector.shape_cast %14 : vector<32xf32> to vector<32x1xf32>
    %cst_10 = arith.constant 9.99999996E-13 : f32
    %16 = vector.broadcast %cst_10 : f32 to vector<32x1xf32>
    %17 = arith.maximumf %15, %16 : vector<32x1xf32>
    %18 = tpu.reciprocal %17 : vector<32x1xf32> -> vector<32x1xf32>
    %19 = vector.broadcast %18 : vector<32x1xf32> to vector<32x81xf32>
    %20 = arith.mulf %12, %19 : vector<32x81xf32>
    %c0_11 = arith.constant 0 : index
    %c0_12 = arith.constant 0 : index
    %21 = vector.load %arg5[%c0_11, %c0_12] : memref<81x10xf32, #tpu.memory_space<vmem>>, vector<81x10xf32>
    %cst_13 = arith.constant dense<0.000000e+00> : vector<32x10xf32>
    %22 = tpu.matmul %20, %21, %cst_13 {dimension_numbers = #tpu.dot_dimension_numbers<[1], [0], [0], [1], [0, 0, 1, 1], [], []>} : vector<32x81xf32>, vector<81x10xf32>, vector<32x10xf32> -> vector<32x10xf32>
    %23 = vector.extract_strided_slice %22 {offsets = [0, 8], sizes = [32, 2], strides = [1, 1]} : vector<32x10xf32> to vector<32x2xf32>
    %24 = vector.extract_strided_slice %0 {offsets = [0, 0], sizes = [32, 1], strides = [1, 1]} : vector<32x4xf32> to vector<32x1xf32>
    %25 = vector.extract_strided_slice %22 {offsets = [0, 0], sizes = [32, 2], strides = [1, 1]} : vector<32x10xf32> to vector<32x2xf32>
    %26 = vector.broadcast %24 : vector<32x1xf32> to vector<32x2xf32>
    %27 = arith.mulf %26, %25 : vector<32x2xf32>
    %28 = arith.addf %23, %27 : vector<32x2xf32>
    %29 = vector.extract_strided_slice %0 {offsets = [0, 1], sizes = [32, 1], strides = [1, 1]} : vector<32x4xf32> to vector<32x1xf32>
    %30 = vector.extract_strided_slice %22 {offsets = [0, 2], sizes = [32, 2], strides = [1, 1]} : vector<32x10xf32> to vector<32x2xf32>
    %31 = vector.broadcast %29 : vector<32x1xf32> to vector<32x2xf32>
    %32 = arith.mulf %31, %30 : vector<32x2xf32>
    %33 = arith.addf %28, %32 : vector<32x2xf32>
    %34 = vector.extract_strided_slice %0 {offsets = [0, 2], sizes = [32, 1], strides = [1, 1]} : vector<32x4xf32> to vector<32x1xf32>
    %35 = vector.extract_strided_slice %22 {offsets = [0, 4], sizes = [32, 2], strides = [1, 1]} : vector<32x10xf32> to vector<32x2xf32>
    %36 = vector.broadcast %34 : vector<32x1xf32> to vector<32x2xf32>
    %37 = arith.mulf %36, %35 : vector<32x2xf32>
    %38 = arith.addf %33, %37 : vector<32x2xf32>
    %39 = vector.extract_strided_slice %0 {offsets = [0, 3], sizes = [32, 1], strides = [1, 1]} : vector<32x4xf32> to vector<32x1xf32>
    %40 = vector.extract_strided_slice %22 {offsets = [0, 6], sizes = [32, 2], strides = [1, 1]} : vector<32x10xf32> to vector<32x2xf32>
    %41 = vector.broadcast %39 : vector<32x1xf32> to vector<32x2xf32>
    %42 = arith.mulf %41, %40 : vector<32x2xf32>
    %43 = arith.addf %38, %42 : vector<32x2xf32>
    %c0_14 = arith.constant 0 : index
    %c0_15 = arith.constant 0 : index
    %44 = vector.load %arg6[%c0_14, %c0_15] : memref<32x2xf32, #tpu.memory_space<vmem>>, vector<32x2xf32>
    tpu.vector_store %arg6[%c0_14, %c0_15], %43 {strides = array<i32>} : memref<32x2xf32, #tpu.memory_space<vmem>>, vector<32x2xf32>,
    return
  }
  func.func @transform_0(%arg0: i32) -> (i32, i32) {
    %c0_i32 = arith.constant 0 : i32
    %c0_i32_0 = arith.constant 0 : i32
    return %arg0, %c0_i32 : i32, i32
  }
  func.func @transform_1(%arg0: i32) -> (i32, i32) {
    %c0_i32 = arith.constant 0 : i32
    %c0_i32_0 = arith.constant 0 : i32
    %c0_i32_1 = arith.constant 0 : i32
    return %c0_i32, %c0_i32_0 : i32, i32
  }
  func.func @transform_2(%arg0: i32) -> (i32, i32) {
    %c0_i32 = arith.constant 0 : i32
    %c0_i32_0 = arith.constant 0 : i32
    %c0_i32_1 = arith.constant 0 : i32
    return %c0_i32, %c0_i32_0 : i32, i32
  }
  func.func @transform_3(%arg0: i32) -> (i32, i32) {
    %c0_i32 = arith.constant 0 : i32
    %c0_i32_0 = arith.constant 0 : i32
    %c0_i32_1 = arith.constant 0 : i32
    return %c0_i32, %c0_i32_0 : i32, i32
  }
  func.func @transform_4(%arg0: i32) -> (i32, i32) {
    %c0_i32 = arith.constant 0 : i32
    %c0_i32_0 = arith.constant 0 : i32
    %c0_i32_1 = arith.constant 0 : i32
    return %c0_i32, %c0_i32_0 : i32, i32
  }
  func.func @transform_5(%arg0: i32) -> (i32, i32) {
    %c0_i32 = arith.constant 0 : i32
    %c0_i32_0 = arith.constant 0 : i32
    return %arg0, %c0_i32 : i32, i32
  }
}

</mosaic_0001>

<llo_original>
// kernel: tpu_custom_call.1
$region0: #{tpu_custom_call.1}
  #allocation0 [shape = 'u32[]', space=smem, size = 0x4, offset = 0x4, fixed_abs, tag = 'smem constant byte address 0x4 - core index']
  #allocation1 [shape = 'u32[144,128]{1,0:T(1,128)}', space=vmem, size = 0x12000, scoped, tag = 'internal scratch']
  %s0 = inlined_call_operand.vmem [shape: f32[64,4], index: 0, kind: input, shape index: {}]
  %s1 = inlined_call_operand.vmem [shape: f32[4,81], index: 1, kind: input, shape index: {}]
  %s2 = inlined_call_operand.vmem [shape: f32[4,81], index: 2, kind: input, shape index: {}]
  %s3 = inlined_call_operand.vmem [shape: f32[1,81], index: 3, kind: input, shape index: {}]
  %s4 = inlined_call_operand.vmem [shape: f32[81,10], index: 4, kind: input, shape index: {}]
  %s5 = inlined_call_operand.vmem [shape: f32[64,2], index: 5, kind: output, shape index: {}]
  %s6 = sld [smem:[#allocation0]]
  $region53: #{tpu_custom_call.1} parent=0
    _
  %s8 = ssub.s32 1, %s6
  %s9 = scalar_select 0, %s8, %s6
  loop: start=0, step=1, limit=4
  $region2: #{tpu_custom_call.1} parent=0 // loop_pre_header
    _
  $region3: #{tpu_custom_call.1} parent=0 // loop_header
    %s11 = sphi 0, %s15
    %p12 = scmp.ge.s32.totalorder %s11, 4
    %s21 = sphi 0, %s23
    %s24 = sphi 0, %s21
    %s25 = sphi 0, %s24
    %s41 = sphi 0, %s25
    %s45 = sphi 0, %s45
    %s47 = sphi 0, %s45
    %s48 = sphi 0, %s47
    %s62 = sphi 0, %s48
    %s66 = sphi 0, %s66
    %s68 = sphi 0, %s66
    %s69 = sphi 0, %s68
    %s83 = sphi 0, %s69
    %s87 = sphi 0, %s87
    %s89 = sphi 0, %s87
    %s90 = sphi 0, %s89
    %s104 = sphi 0, %s90
    %s108 = sphi 0, %s108
    %s110 = sphi 0, %s108
    %s111 = sphi 0, %s110
    %s125 = sphi 0, %s111
    %s131 = sphi 0, %s133
    %s134 = sphi 0, %s131
    %s135 = sphi 0, %s134
    %s151 = sphi 0, %s135
  $region4: #{tpu_custom_call.1} parent=0 // loop_header_branch
    %14 = sbr.rel (%p12) target = $region8
  $region5: #{tpu_custom_call.1} parent=0 // loop_body
    %s16 = ssub.s32 %s11, 1
    %s17 = ssub.s32 %s11, 2
    %s18 = sadd.s32 %s11, 1
    %s19 = ssub.s32 %s11, %s18
    %p20 = scmp.eq.s32.totalorder %s19, 0
    %s22 = sadd.s32 %s21, 1
    %s23 = scalar_select %p20, %s21, %s22
    %p26 = pneg %p20
    %p27 = scmp.eq.s32.totalorder %s11, 1
    %p28 = por %p26, %p27
    %p29 = scmp.ne.s32.totalorder %s21, %s24
    %p30 = scmp.eq.s32.totalorder %s11, 0
    %p31 = por %p29, %p30
    %p32 = scmp.ne.s32.totalorder %s21, %s24
    %p33 = scmp.eq.s32.totalorder %s16, 1
    %p34 = por %p32, %p33
    %p35 = scmp.ne.s32.totalorder %s24, %s25
    %p36 = scmp.eq.s32.totalorder %s16, 0
    %p37 = por %p35, %p36
    %p38 = scmp.ne.s32.totalorder %s24, %s25
    %p39 = scmp.eq.s32.totalorder %s17, 1
    %p40 = por %p38, %p39
    %p42 = scmp.ne.s32.totalorder %s25, %s41
    %p43 = scmp.eq.s32.totalorder %s17, 0
    %p44 = por %p42, %p43
    %s46 = sadd.s32 %s45, 1
    %p49 = scmp.eq.s32.totalorder %s11, 1
    %p50 = scmp.ne.s32.totalorder %s45, %s47
    %p51 = scmp.eq.s32.totalorder %s11, 0
    %p52 = por %p50, %p51
    %p53 = scmp.ne.s32.totalorder %s45, %s47
    %p54 = scmp.eq.s32.totalorder %s16, 1
    %p55 = por %p53, %p54
    %p56 = scmp.ne.s32.totalorder %s47, %s48
    %p57 = scmp.eq.s32.totalorder %s16, 0
    %p58 = por %p56, %p57
    %p59 = scmp.ne.s32.totalorder %s47, %s48
    %p60 = scmp.eq.s32.totalorder %s17, 1
    %p61 = por %p59, %p60
    %p63 = scmp.ne.s32.totalorder %s48, %s62
    %p64 = scmp.eq.s32.totalorder %s17, 0
    %p65 = por %p63, %p64
    %s67 = sadd.s32 %s66, 1
    %p70 = scmp.eq.s32.totalorder %s11, 1
    %p71 = scmp.ne.s32.totalorder %s66, %s68
    %p72 = scmp.eq.s32.totalorder %s11, 0
    %p73 = por %p71, %p72
    %p74 = scmp.ne.s32.totalorder %s66, %s68
    %p75 = scmp.eq.s32.totalorder %s16, 1
    %p76 = por %p74, %p75
    %p77 = scmp.ne.s32.totalorder %s68, %s69
    %p78 = scmp.eq.s32.totalorder %s16, 0
    %p79 = por %p77, %p78
    %p80 = scmp.ne.s32.totalorder %s68, %s69
    %p81 = scmp.eq.s32.totalorder %s17, 1
    %p82 = por %p80, %p81
    %p84 = scmp.ne.s32.totalorder %s69, %s83
    %p85 = scmp.eq.s32.totalorder %s17, 0
    %p86 = por %p84, %p85
    %s88 = sadd.s32 %s87, 1
    %p91 = scmp.eq.s32.totalorder %s11, 1
    %p92 = scmp.ne.s32.totalorder %s87, %s89
    %p93 = scmp.eq.s32.totalorder %s11, 0
    %p94 = por %p92, %p93
    %p95 = scmp.ne.s32.totalorder %s87, %s89
    %p96 = scmp.eq.s32.totalorder %s16, 1
    %p97 = por %p95, %p96
    %p98 = scmp.ne.s32.totalorder %s89, %s90
    %p99 = scmp.eq.s32.totalorder %s16, 0
    %p100 = por %p98, %p99
    %p101 = scmp.ne.s32.totalorder %s89, %s90
    %p102 = scmp.eq.s32.totalorder %s17, 1
    %p103 = por %p101, %p102
    %p105 = scmp.ne.s32.totalorder %s90, %s104
    %p106 = scmp.eq.s32.totalorder %s17, 0
    %p107 = por %p105, %p106
    %s109 = sadd.s32 %s108, 1
    %p112 = scmp.eq.s32.totalorder %s11, 1
    %p113 = scmp.ne.s32.totalorder %s108, %s110
    %p114 = scmp.eq.s32.totalorder %s11, 0
    %p115 = por %p113, %p114
    %p116 = scmp.ne.s32.totalorder %s108, %s110
    %p117 = scmp.eq.s32.totalorder %s16, 1
    %p118 = por %p116, %p117
    %p119 = scmp.ne.s32.totalorder %s110, %s111
    %p120 = scmp.eq.s32.totalorder %s16, 0
    %p121 = por %p119, %p120
    %p122 = scmp.ne.s32.totalorder %s110, %s111
    %p123 = scmp.eq.s32.totalorder %s17, 1
    %p124 = por %p122, %p123
    %p126 = scmp.ne.s32.totalorder %s111, %s125
    %p127 = scmp.eq.s32.totalorder %s17, 0
    %p128 = por %p126, %p127
    %s129 = ssub.s32 %s11, %s18
    %p130 = scmp.eq.s32.totalorder %s129, 0
    %s132 = sadd.s32 %s131, 1
    %s133 = scalar_select %p130, %s131, %s132
    %p136 = pneg %p130
    %p137 = scmp.eq.s32.totalorder %s11, 1
    %p138 = por %p136, %p137
    %p139 = scmp.ne.s32.totalorder %s131, %s134
    %p140 = scmp.eq.s32.totalorder %s11, 0
    %p141 = por %p139, %p140
    %p142 = scmp.ne.s32.totalorder %s131, %s134
    %p143 = scmp.eq.s32.totalorder %s16, 1
    %p144 = por %p142, %p143
    %p145 = scmp.ne.s32.totalorder %s134, %s135
    %p146 = scmp.eq.s32.totalorder %s16, 0
    %p147 = por %p145, %p146
    %p148 = scmp.ne.s32.totalorder %s134, %s135
    %p149 = scmp.eq.s32.totalorder %s17, 1
    %p150 = por %p148, %p149
    %p152 = scmp.ne.s32.totalorder %s135, %s151
    %p153 = scmp.eq.s32.totalorder %s17, 0
    %p154 = por %p152, %p153
    %p155 = scmp.le.s32.totalorder 1, %s11
    %p156 = scmp.lt.s32.totalorder %s11, 3
    %p157 = pnand %p155, %p156
    %p158 = pneg %p157
    // Predicated region
    $region9: #{tpu_custom_call.1} parent=5 // pred_check
      _
    $region10: #{tpu_custom_call.1} parent=5 // pred_check_branch
      %160 = sbr.rel (%p157) target = $region12
    $region11: #{tpu_custom_call.1} parent=5 // pred_region
      %s161 = ssub.s32 %s11, 1
      // Predicated region
      $region13: #{tpu_custom_call.1} parent=11 // pred_check
        %p162 = pneg %p58
      $region14: #{tpu_custom_call.1} parent=11 // pred_check_branch
        %164 = sbr.rel (%p162) target = $region16
      $region15: #{tpu_custom_call.1} parent=11 // pred_region
        _
      $region16: #{tpu_custom_call.1} parent=11 // pred_fallthru
        _
      // Predicated region
      $region17: #{tpu_custom_call.1} parent=11 // pred_check
        %p165 = pneg %p79
      $region18: #{tpu_custom_call.1} parent=11 // pred_check_branch
        %167 = sbr.rel (%p165) target = $region20
      $region19: #{tpu_custom_call.1} parent=11 // pred_region
        _
      $region20: #{tpu_custom_call.1} parent=11 // pred_fallthru
        _
      // Predicated region
      $region21: #{tpu_custom_call.1} parent=11 // pred_check
        %p168 = pneg %p100
      $region22: #{tpu_custom_call.1} parent=11 // pred_check_branch
        %170 = sbr.rel (%p168) target = $region24
      $region23: #{tpu_custom_call.1} parent=11 // pred_region
        _
      $region24: #{tpu_custom_call.1} parent=11 // pred_fallthru
        _
      // Predicated region
      $region25: #{tpu_custom_call.1} parent=11 // pred_check
        %p171 = pneg %p121
      $region26: #{tpu_custom_call.1} parent=11 // pred_check_branch
        %173 = sbr.rel (%p171) target = $region28
      $region27: #{tpu_custom_call.1} parent=11 // pred_region
        _
      $region28: #{tpu_custom_call.1} parent=11 // pred_fallthru
        _
    $region12: #{tpu_custom_call.1} parent=5 // pred_fallthru
      _
    %p174 = scmp.lt.s32.totalorder %s11, 2
    // Predicated region
    $region29: #{tpu_custom_call.1} parent=5 // pred_check
      %p175 = pneg %p174
    $region30: #{tpu_custom_call.1} parent=5 // pred_check_branch
      %177 = sbr.rel (%p175) target = $region32
    $region31: #{tpu_custom_call.1} parent=5 // pred_region
      // Predicated region
      $region33: #{tpu_custom_call.1} parent=31 // pred_check
        %p178 = pneg %p31
      $region34: #{tpu_custom_call.1} parent=31 // pred_check_branch
        %180 = sbr.rel (%p178) target = $region36
      $region35: #{tpu_custom_call.1} parent=31 // pred_region
        %s181 = smul.u32 4, %s11
        %p182 = scmp.lt.s32.totalorder %s181, 7
        %s183 = scalar_select %p182, %s181, 7
        %s184 = smul.addr %s183, 8
        %s185 = scalar_lea.vmem %s0, %s184
        %s186 = smul.u32 4, %s11
      $region36: #{tpu_custom_call.1} parent=31 // pred_fallthru
        _
    $region32: #{tpu_custom_call.1} parent=5 // pred_fallthru
      _
    %p187 = scmp.le.s32.totalorder 1, %s11
    %p188 = scmp.lt.s32.totalorder %s11, 3
    %p189 = pnand %p187, %p188
    %p190 = pneg %p189
    // Predicated region
    $region37: #{tpu_custom_call.1} parent=5 // pred_check
      _
    $region38: #{tpu_custom_call.1} parent=5 // pred_check_branch
      %192 = sbr.rel (%p189) target = $region40
    $region39: #{tpu_custom_call.1} parent=5 // pred_region
      %s193 = ssub.s32 %s11, 1
      %s194 = smul.u32 4, %s16
      %p195 = scmp.lt.s32.totalorder %s194, 7
      %s196 = scalar_select %p195, %s194, 7
      %s197 = smul.addr %s196, 8
      %s198 = scalar_lea.vmem %s0, %s197
      %p199 = pneg %p37
      %p200 = pneg %p34
      %p201 = pneg %p58
      %p202 = pneg %p55
      %p203 = pneg %p79
      %p204 = pneg %p76
      %p205 = pneg %p100
      %p206 = pneg %p97
      %p207 = pneg %p121
      %p208 = pneg %p118
      %p209 = pneg %p147
      %p210 = pneg %p144
      %s211 = smul.u32 4, %s16
      %p212 = scmp.lt.s32.totalorder %s211, 7
      %s213 = scalar_select %p212, %s211, 7
      %s214 = smul.addr %s213, 8
      %s215 = scalar_lea.vmem %s5, %s214
      %s216 = smul.u32 4, %s16
      %p217 = scmp.lt.s32.totalorder %s216, 7
      %s218 = scalar_select %p217, %s216, 7
      %s219 = smul.addr %s218, 8
      %s220 = scalar_lea.vmem %s0, %s219
      %s221 = smul.u32 4, %s16
      %s222 = smul.u32 4, %s16
      %p223 = scmp.lt.s32.totalorder %s222, 7
      %s224 = scalar_select %p223, %s222, 7
      %s225 = smul.addr %s224, 8
      %s226 = scalar_lea.vmem %s5, %s225
      %s227 = smul.u32 4, %s16
      %v228 = vld [vmem:[%s220] sm:$0xff]
      %v229 = vld [vmem:[%s220 + $0x8] sm:$0xff]
      %v230 = vld [vmem:[%s220 + $0x10] sm:$0xff]
      %v231 = vld [vmem:[%s220 + $0x18] sm:$0xff]
      %v232 = vmul.f32 %v228, %v228
      %v233 = vmul.f32 %v229, %v229
      %v234 = vmul.f32 %v230, %v230
      %v235 = vmul.f32 %v231, %v231
      %v236 = vld [vmem:[%s1] sm:$0xf]
      %v237 = vld [vmem:[%s2] sm:$0xf]
      %vm238 = vcmask 31744
      %v240 = vsel %vm238, %v228, 0
      %v243 = vsel %vm238, %v229, 0
      %v246 = vsel %vm238, %v230, 0
      %v249 = vsel %vm238, %v231, 0
      %vm251 = vcmask 1043456
      %v253 = vsel %vm251, %v237, 0
      %255 = vmatprep.subr.mxu0 0.0
      %256 = vmatpush1.msra.mxu0 %v253
      %257 = vmatprep.subr.mxu0 0.0
      %258 = vmatpush1.msra.mxu0 0.0
      %259 = vmatprep.subr.mxu0 0.0
      %260 = vmatpush1.msra.mxu0 0.0
      %261 = vmatprep.subr.mxu0 0.0
      %262 = vmatpush1.msra.mxu0 0.0
      %263 = vmatprep.subr.mxu0 0.0
      %264 = vmatpush1.msra.mxu0 0.0
      %265 = vmatprep.subr.mxu0 0.0
      %266 = vmatpush1.msra.mxu0 0.0
      %267 = vmatprep.subr.mxu0 0.0
      %268 = vmatpush1.msra.mxu0 0.0
      %269 = vmatprep.subr.mxu0 0.0
      %270 = vmatpush1.msra.mxu0 0.0
      %271 = vmatprep.subr.mxu0 0.0
      %272 = vmatpush1.msra.mxu0 0.0
      %273 = vmatprep.subr.mxu0 0.0
      %274 = vmatpush1.msra.mxu0 0.0
      %275 = vmatprep.subr.mxu0 0.0
      %276 = vmatpush1.msra.mxu0 0.0
      %277 = vmatprep.subr.mxu0 0.0
      %278 = vmatpush1.msra.mxu0 0.0
      %279 = vmatprep.subr.mxu0 0.0
      %280 = vmatpush1.msra.mxu0 0.0
      %281 = vmatprep.subr.mxu0 0.0
      %282 = vmatpush1.msra.mxu0 0.0
      %283 = vmatprep.subr.mxu0 0.0
      %284 = vmatpush1.msra.mxu0 0.0
      %285 = vmatprep.subr.mxu0 0.0
      %286 = vmatpush1.msra.mxu0 0.0
      %287 = vmatprep.subr.mxu0 0.0
      %288 = vmatpush1.msra.mxu0 0.0
      %289 = vmatprep.subr.mxu0 0.0
      %290 = vmatpush1.msra.mxu0 0.0
      %291 = vmatprep.subr.mxu0 0.0
      %292 = vmatpush1.msra.mxu0 0.0
      %293 = vmatprep.subr.mxu0 0.0
      %294 = vmatpush1.msra.mxu0 0.0
      %295 = vmatprep.subr.mxu0 0.0
      %296 = vmatpush1.msra.mxu0 0.0
      %297 = vmatprep.subr.mxu0 0.0
      %298 = vmatpush1.msra.mxu0 0.0
      %299 = vmatprep.subr.mxu0 0.0
      %300 = vmatpush1.msra.mxu0 0.0
      %301 = vmatprep.subr.mxu0 0.0
      %302 = vmatpush1.msra.mxu0 0.0
      %303 = vmatprep.subr.mxu0 0.0
      %304 = vmatpush1.msra.mxu0 0.0
      %305 = vmatprep.subr.mxu0 0.0
      %306 = vmatpush1.msra.mxu0 0.0
      %307 = vmatprep.subr.mxu0 0.0
      %308 = vmatpush1.msra.mxu0 0.0
      %309 = vmatprep.subr.mxu0 0.0
      %310 = vmatpush1.msra.mxu0 0.0
      %311 = vmatprep.subr.mxu0 0.0
      %312 = vmatpush1.msra.mxu0 0.0
      %313 = vmatprep.subr.mxu0 0.0
      %314 = vmatpush1.msra.mxu0 0.0
      %315 = vmatprep.subr.mxu0 0.0
      %316 = vmatpush1.msra.mxu0 0.0
      %317 = vmatprep.subr.mxu0 0.0
      %318 = vmatpush1.msra.mxu0 0.0
      %319 = vmatprep.mubr.f32.mxu0 0.0
      %320 = vmatmul.mubr.f32.gmra.mrb[0].mxu0 %v240
      %v321 = vpop.f32.mrb[0].mxu0
      %v322 = vadd.f32 0.0, %v321
      %v323 = vpop.f32.mrb[0].mxu0
      %324 = vmatprep.mubr.f32.mxu0 0.0
      %325 = vmatmul.mubr.f32.gmra.mrb[0].mxu0 %v243
      %v326 = vpop.f32.mrb[0].mxu0
      %v327 = vadd.f32 0.0, %v326
      %v328 = vpop.f32.mrb[0].mxu0
      %329 = vmatprep.mubr.f32.mxu0 0.0
      %330 = vmatmul.mubr.f32.gmra.mrb[0].mxu0 %v246
      %v331 = vpop.f32.mrb[0].mxu0
      %v332 = vadd.f32 0.0, %v331
      %v333 = vpop.f32.mrb[0].mxu0
      %334 = vmatprep.mubr.f32.mxu0 0.0
      %335 = vmatmul.mubr.f32.gmra.mrb[0].mxu0 %v249
      %v336 = vpop.f32.mrb[0].mxu0
      %v337 = vadd.f32 0.0, %v336
      %v338 = vpop.f32.mrb[0].mxu0
      %339 = vdwg.mxu0
      %v341 = vsel %vm238, %v232, 0
      %v344 = vsel %vm238, %v233, 0
      %v347 = vsel %vm238, %v234, 0
      %v350 = vsel %vm238, %v235, 0
      %v353 = vsel %vm251, %v236, 0
      %355 = vmatprep.subr.mxu0 0.0
      %356 = vmatpush1.msra.mxu0 %v353
      %357 = vmatprep.subr.mxu0 0.0
      %358 = vmatpush1.msra.mxu0 0.0
      %359 = vmatprep.subr.mxu0 0.0
      %360 = vmatpush1.msra.mxu0 0.0
      %361 = vmatprep.subr.mxu0 0.0
      %362 = vmatpush1.msra.mxu0 0.0
      %363 = vmatprep.subr.mxu0 0.0
      %364 = vmatpush1.msra.mxu0 0.0
      %365 = vmatprep.subr.mxu0 0.0
      %366 = vmatpush1.msra.mxu0 0.0
      %367 = vmatprep.subr.mxu0 0.0
      %368 = vmatpush1.msra.mxu0 0.0
      %369 = vmatprep.subr.mxu0 0.0
      %370 = vmatpush1.msra.mxu0 0.0
      %371 = vmatprep.subr.mxu0 0.0
      %372 = vmatpush1.msra.mxu0 0.0
      %373 = vmatprep.subr.mxu0 0.0
      %374 = vmatpush1.msra.mxu0 0.0
      %375 = vmatprep.subr.mxu0 0.0
      %376 = vmatpush1.msra.mxu0 0.0
      %377 = vmatprep.subr.mxu0 0.0
      %378 = vmatpush1.msra.mxu0 0.0
      %379 = vmatprep.subr.mxu0 0.0
      %380 = vmatpush1.msra.mxu0 0.0
      %381 = vmatprep.subr.mxu0 0.0
      %382 = vmatpush1.msra.mxu0 0.0
      %383 = vmatprep.subr.mxu0 0.0
      %384 = vmatpush1.msra.mxu0 0.0
      %385 = vmatprep.subr.mxu0 0.0
      %386 = vmatpush1.msra.mxu0 0.0
      %387 = vmatprep.subr.mxu0 0.0
      %388 = vmatpush1.msra.mxu0 0.0
      %389 = vmatprep.subr.mxu0 0.0
      %390 = vmatpush1.msra.mxu0 0.0
      %391 = vmatprep.subr.mxu0 0.0
      %392 = vmatpush1.msra.mxu0 0.0
      %393 = vmatprep.subr.mxu0 0.0
      %394 = vmatpush1.msra.mxu0 0.0
      %395 = vmatprep.subr.mxu0 0.0
      %396 = vmatpush1.msra.mxu0 0.0
      %397 = vmatprep.subr.mxu0 0.0
      %398 = vmatpush1.msra.mxu0 0.0
      %399 = vmatprep.subr.mxu0 0.0
      %400 = vmatpush1.msra.mxu0 0.0
      %401 = vmatprep.subr.mxu0 0.0
      %402 = vmatpush1.msra.mxu0 0.0
      %403 = vmatprep.subr.mxu0 0.0
      %404 = vmatpush1.msra.mxu0 0.0
      %405 = vmatprep.subr.mxu0 0.0
      %406 = vmatpush1.msra.mxu0 0.0
      %407 = vmatprep.subr.mxu0 0.0
      %408 = vmatpush1.msra.mxu0 0.0
      %409 = vmatprep.subr.mxu0 0.0
      %410 = vmatpush1.msra.mxu0 0.0
      %411 = vmatprep.subr.mxu0 0.0
      %412 = vmatpush1.msra.mxu0 0.0
      %413 = vmatprep.subr.mxu0 0.0
      %414 = vmatpush1.msra.mxu0 0.0
      %415 = vmatprep.subr.mxu0 0.0
      %416 = vmatpush1.msra.mxu0 0.0
      %417 = vmatprep.subr.mxu0 0.0
      %418 = vmatpush1.msra.mxu0 0.0
      %419 = vmatprep.mubr.f32.mxu0 0.0
      %420 = vmatmul.mubr.f32.gmra.mrb[0].mxu0 %v341
      %v421 = vpop.f32.mrb[0].mxu0
      %v422 = vadd.f32 %v322, %v421
      %v423 = vpop.f32.mrb[0].mxu0
      %424 = vmatprep.mubr.f32.mxu0 0.0
      %425 = vmatmul.mubr.f32.gmra.mrb[0].mxu0 %v344
      %v426 = vpop.f32.mrb[0].mxu0
      %v427 = vadd.f32 %v327, %v426
      %v428 = vpop.f32.mrb[0].mxu0
      %429 = vmatprep.mubr.f32.mxu0 0.0
      %430 = vmatmul.mubr.f32.gmra.mrb[0].mxu0 %v347
      %v431 = vpop.f32.mrb[0].mxu0
      %v432 = vadd.f32 %v332, %v431
      %v433 = vpop.f32.mrb[0].mxu0
      %434 = vmatprep.mubr.f32.mxu0 0.0
      %435 = vmatmul.mubr.f32.gmra.mrb[0].mxu0 %v350
      %v436 = vpop.f32.mrb[0].mxu0
      %v437 = vadd.f32 %v337, %v436
      %v438 = vpop.f32.mrb[0].mxu0
      %439 = vdwg.mxu0
      %v440 = vld [vmem:[%s3] sm:$0x1]
      %v442 = vlaneseq
      %v443 = vshrl.u32 %v442, 7
      %v444 = vsub.s32 0, %v443
      %v445 = vrot.slane %v440, %v444
      %v447 = vadd.f32 %v422, %v445
      %v448 = vadd.f32 %v427, %v445
      %v449 = vadd.f32 %v432, %v445
      %v450 = vadd.f32 %v437, %v445
      %v451 = vsub.f32 0.0, %v447
      %v452 = vsub.f32 0.0, %v448
      %v453 = vsub.f32 0.0, %v449
      %v454 = vsub.f32 0.0, %v450
      %v455 = vmul.f32 %v451, 1.442695
      %v456 = vpow.pop %v455
      %v457 = vmul.f32 %v452, 1.442695
      %v458 = vpow.pop %v457
      %v459 = vmul.f32 %v453, 1.442695
      %v460 = vpow.pop %v459
      %v461 = vmul.f32 %v454, 1.442695
      %v462 = vpow.pop %v461
      %v463 = vand.u32 2147483647, %v456
      %v464 = vand.u32 2147483647, %v458
      %v465 = vand.u32 2147483647, %v460
      %v466 = vand.u32 2147483647, %v462
      %vm467 = vcmask 662528
      %v468 = vsel %vm467, %v463, 0.0
      %469 = vadd.xlane.f32.xlu0 %v468
      %v470 = vpop.xlane.xlu0 %469
      %v471 = vsel %vm467, %v464, 0.0
      %472 = vadd.xlane.f32.xlu0 %v471
      %v473 = vpop.xlane.xlu0 %472
      %v474 = vsel %vm467, %v465, 0.0
      %475 = vadd.xlane.f32.xlu0 %v474
      %v476 = vpop.xlane.xlu0 %475
      %v477 = vsel %vm467, %v466, 0.0
      %478 = vadd.xlane.f32.xlu0 %v477
      %v479 = vpop.xlane.xlu0 %478
      %v480 = vmax.f32 %v470, 1e-12
      %v481 = vmax.f32 %v473, 1e-12
      %v482 = vmax.f32 %v476, 1e-12
      %v483 = vmax.f32 %v479, 1e-12
      %v484 = vrcp.pop %v480
      %v485 = vrcp.pop %v481
      %v486 = vrcp.pop %v482
      %v487 = vrcp.pop %v483
      %v488 = vmul.f32 %v456, %v484
      %v489 = vmul.f32 %v458, %v485
      %v490 = vmul.f32 %v460, %v486
      %v491 = vmul.f32 %v462, %v487
      %v492 = vld [vmem:[%s4] sm:$0xff]
      %v493 = vld [vmem:[%s4 + $0x8] sm:$0xff]
      %v494 = vld [vmem:[%s4 + $0x10] sm:$0xff]
      %v495 = vld [vmem:[%s4 + $0x18] sm:$0xff]
      %v496 = vld [vmem:[%s4 + $0x20] sm:$0xff]
      %v497 = vld [vmem:[%s4 + $0x28] sm:$0xff]
      %v498 = vld [vmem:[%s4 + $0x30] sm:$0xff]
      %v499 = vld [vmem:[%s4 + $0x38] sm:$0xff]
      %v500 = vld [vmem:[%s4 + $0x40] sm:$0xff]
      %v501 = vld [vmem:[%s4 + $0x48] sm:$0xff]
      %v502 = vld [vmem:[%s4 + $0x50] sm:$0x1]
      %v504 = vsel %vm467, %v488, 0
      %v507 = vsel %vm467, %v489, 0
      %v510 = vsel %vm467, %v490, 0
      %v513 = vsel %vm467, %v491, 0
      %vm515 = vcmask 1040384
      %v517 = vsel %vm515, %v502, 0
      %519 = vmatprep.subr.mxu0 0.0
      %520 = vmatpush1.msra.mxu0 %v492
      %521 = vmatprep.subr.mxu0 0.0
      %522 = vmatpush1.msra.mxu0 %v493
      %523 = vmatprep.subr.mxu0 0.0
      %524 = vmatpush1.msra.mxu0 %v494
      %525 = vmatprep.subr.mxu0 0.0
      %526 = vmatpush1.msra.mxu0 %v495
      %527 = vmatprep.subr.mxu0 0.0
      %528 = vmatpush1.msra.mxu0 %v496
      %529 = vmatprep.subr.mxu0 0.0
      %530 = vmatpush1.msra.mxu0 %v497
      %531 = vmatprep.subr.mxu0 0.0
      %532 = vmatpush1.msra.mxu0 %v498
      %533 = vmatprep.subr.mxu0 0.0
      %534 = vmatpush1.msra.mxu0 %v499
      %535 = vmatprep.subr.mxu0 0.0
      %536 = vmatpush1.msra.mxu0 %v500
      %537 = vmatprep.subr.mxu0 0.0
      %538 = vmatpush1.msra.mxu0 %v501
      %539 = vmatprep.subr.mxu0 0.0
      %540 = vmatpush1.msra.mxu0 %v517
      %541 = vmatprep.subr.mxu0 0.0
      %542 = vmatpush1.msra.mxu0 0.0
      %543 = vmatprep.subr.mxu0 0.0
      %544 = vmatpush1.msra.mxu0 0.0
      %545 = vmatprep.subr.mxu0 0.0
      %546 = vmatpush1.msra.mxu0 0.0
      %547 = vmatprep.subr.mxu0 0.0
      %548 = vmatpush1.msra.mxu0 0.0
      %549 = vmatprep.subr.mxu0 0.0
      %550 = vmatpush1.msra.mxu0 0.0
      %551 = vmatprep.subr.mxu0 0.0
      %552 = vmatpush1.msra.mxu0 0.0
      %553 = vmatprep.subr.mxu0 0.0
      %554 = vmatpush1.msra.mxu0 0.0
      %555 = vmatprep.subr.mxu0 0.0
      %556 = vmatpush1.msra.mxu0 0.0
      %557 = vmatprep.subr.mxu0 0.0
      %558 = vmatpush1.msra.mxu0 0.0
      %559 = vmatprep.subr.mxu0 0.0
      %560 = vmatpush1.msra.mxu0 0.0
      %561 = vmatprep.subr.mxu0 0.0
      %562 = vmatpush1.msra.mxu0 0.0
      %563 = vmatprep.subr.mxu0 0.0
      %564 = vmatpush1.msra.mxu0 0.0
      %565 = vmatprep.subr.mxu0 0.0
      %566 = vmatpush1.msra.mxu0 0.0
      %567 = vmatprep.subr.mxu0 0.0
      %568 = vmatpush1.msra.mxu0 0.0
      %569 = vmatprep.subr.mxu0 0.0
      %570 = vmatpush1.msra.mxu0 0.0
      %571 = vmatprep.subr.mxu0 0.0
      %572 = vmatpush1.msra.mxu0 0.0
      %573 = vmatprep.subr.mxu0 0.0
      %574 = vmatpush1.msra.mxu0 0.0
      %575 = vmatprep.subr.mxu0 0.0
      %576 = vmatpush1.msra.mxu0 0.0
      %577 = vmatprep.subr.mxu0 0.0
      %578 = vmatpush1.msra.mxu0 0.0
      %579 = vmatprep.subr.mxu0 0.0
      %580 = vmatpush1.msra.mxu0 0.0
      %581 = vmatprep.subr.mxu0 0.0
      %582 = vmatpush1.msra.mxu0 0.0
      %583 = vmatprep.mubr.f32.mxu0 0.0
      %584 = vmatmul.mubr.f32.gmra.mrb[0].mxu0 %v504
      %v585 = vpop.f32.mrb[0].mxu0
      %v586 = vadd.f32 0.0, %v585
      %v587 = vpop.f32.mrb[0].mxu0
      %588 = vmatprep.mubr.f32.mxu0 0.0
      %589 = vmatmul.mubr.f32.gmra.mrb[0].mxu0 %v507
      %v590 = vpop.f32.mrb[0].mxu0
      %v591 = vadd.f32 0.0, %v590
      %v592 = vpop.f32.mrb[0].mxu0
      %593 = vmatprep.mubr.f32.mxu0 0.0
      %594 = vmatmul.mubr.f32.gmra.mrb[0].mxu0 %v510
      %v595 = vpop.f32.mrb[0].mxu0
      %v596 = vadd.f32 0.0, %v595
      %v597 = vpop.f32.mrb[0].mxu0
      %598 = vmatprep.mubr.f32.mxu0 0.0
      %599 = vmatmul.mubr.f32.gmra.mrb[0].mxu0 %v513
      %v600 = vpop.f32.mrb[0].mxu0
      %v601 = vadd.f32 0.0, %v600
      %v602 = vpop.f32.mrb[0].mxu0
      %603 = vdwg.mxu0
      %604 = vset.pattern.permute.xlu0 0
      %605 = vperm.xlu0 %604, %v228
      %v606 = vpop.permute.xlu0 %605
      %608 = vset.pattern.permute.xlu0 0
      %609 = vperm.xlu0 %608, %v229
      %v610 = vpop.permute.xlu0 %609
      %612 = vset.pattern.permute.xlu0 0
      %613 = vperm.xlu0 %612, %v230
      %v614 = vpop.permute.xlu0 %613
      %616 = vset.pattern.permute.xlu0 0
      %617 = vperm.xlu0 %616, %v231
      %v618 = vpop.permute.xlu0 %617
      %v620 = vmul.f32 %v606, %v586
      %v621 = vmul.f32 %v610, %v591
      %v622 = vmul.f32 %v614, %v596
      %v623 = vmul.f32 %v618, %v601
      %628 = vrot.lane.b32.xlu0 %v620, 8
      %v629 = vpop.permute.xlu0 %628
      %630 = vrot.lane.b32.xlu0 %v621, 8
      %v631 = vpop.permute.xlu0 %630
      %632 = vrot.lane.b32.xlu0 %v622, 8
      %v633 = vpop.permute.xlu0 %632
      %634 = vrot.lane.b32.xlu0 %v623, 8
      %v635 = vpop.permute.xlu0 %634
      %v640 = vadd.f32 %v586, %v629
      %v641 = vadd.f32 %v591, %v631
      %v642 = vadd.f32 %v596, %v633
      %v643 = vadd.f32 %v601, %v635
      %644 = vset.pattern.permute.xlu0 1
      %645 = vperm.xlu0 %644, %v228
      %v646 = vpop.permute.xlu0 %645
      %648 = vset.pattern.permute.xlu0 1
      %649 = vperm.xlu0 %648, %v229
      %v650 = vpop.permute.xlu0 %649
      %652 = vset.pattern.permute.xlu0 1
      %653 = vperm.xlu0 %652, %v230
      %v654 = vpop.permute.xlu0 %653
      %656 = vset.pattern.permute.xlu0 1
      %657 = vperm.xlu0 %656, %v231
      %v658 = vpop.permute.xlu0 %657
      %v660 = vmul.f32 %v646, %v586
      %v661 = vmul.f32 %v650, %v591
      %v662 = vmul.f32 %v654, %v596
      %v663 = vmul.f32 %v658, %v601
      %668 = vrot.lane.b32.xlu0 %v660, 6
      %v669 = vpop.permute.xlu0 %668
      %670 = vrot.lane.b32.xlu0 %v661, 6
      %v671 = vpop.permute.xlu0 %670
      %672 = vrot.lane.b32.xlu0 %v662, 6
      %v673 = vpop.permute.xlu0 %672
      %674 = vrot.lane.b32.xlu0 %v663, 6
      %v675 = vpop.permute.xlu0 %674
      %v680 = vadd.f32 %v640, %v669
      %v681 = vadd.f32 %v641, %v671
      %v682 = vadd.f32 %v642, %v673
      %v683 = vadd.f32 %v643, %v675
      %684 = vset.pattern.permute.xlu0 2
      %685 = vperm.xlu0 %684, %v228
      %v686 = vpop.permute.xlu0 %685
      %688 = vset.pattern.permute.xlu0 2
      %689 = vperm.xlu0 %688, %v229
      %v690 = vpop.permute.xlu0 %689
      %692 = vset.pattern.permute.xlu0 2
      %693 = vperm.xlu0 %692, %v230
      %v694 = vpop.permute.xlu0 %693
      %696 = vset.pattern.permute.xlu0 2
      %697 = vperm.xlu0 %696, %v231
      %v698 = vpop.permute.xlu0 %697
      %v700 = vmul.f32 %v686, %v586
      %v701 = vmul.f32 %v690, %v591
      %v702 = vmul.f32 %v694, %v596
      %v703 = vmul.f32 %v698, %v601
      %708 = vrot.lane.b32.xlu0 %v700, 4
      %v709 = vpop.permute.xlu0 %708
      %710 = vrot.lane.b32.xlu0 %v701, 4
      %v711 = vpop.permute.xlu0 %710
      %712 = vrot.lane.b32.xlu0 %v702, 4
      %v713 = vpop.permute.xlu0 %712
      %714 = vrot.lane.b32.xlu0 %v703, 4
      %v715 = vpop.permute.xlu0 %714
      %v720 = vadd.f32 %v680, %v709
      %v721 = vadd.f32 %v681, %v711
      %v722 = vadd.f32 %v682, %v713
      %v723 = vadd.f32 %v683, %v715
      %724 = vset.pattern.permute.xlu0 3
      %725 = vperm.xlu0 %724, %v228
      %v726 = vpop.permute.xlu0 %725
      %728 = vset.pattern.permute.xlu0 3
      %729 = vperm.xlu0 %728, %v229
      %v730 = vpop.permute.xlu0 %729
      %732 = vset.pattern.permute.xlu0 3
      %733 = vperm.xlu0 %732, %v230
      %v734 = vpop.permute.xlu0 %733
      %736 = vset.pattern.permute.xlu0 3
      %737 = vperm.xlu0 %736, %v231
      %v738 = vpop.permute.xlu0 %737
      %v740 = vmul.f32 %v726, %v586
      %v741 = vmul.f32 %v730, %v591
      %v742 = vmul.f32 %v734, %v596
      %v743 = vmul.f32 %v738, %v601
      %748 = vrot.lane.b32.xlu0 %v740, 2
      %v749 = vpop.permute.xlu0 %748
      %750 = vrot.lane.b32.xlu0 %v741, 2
      %v751 = vpop.permute.xlu0 %750
      %752 = vrot.lane.b32.xlu0 %v742, 2
      %v753 = vpop.permute.xlu0 %752
      %754 = vrot.lane.b32.xlu0 %v743, 2
      %v755 = vpop.permute.xlu0 %754
      %v760 = vadd.f32 %v720, %v749
      %v761 = vadd.f32 %v721, %v751
      %v762 = vadd.f32 %v722, %v753
      %v763 = vadd.f32 %v723, %v755
      %768 = vrot.lane.b32.xlu0 %v760, 120
      %v769 = vpop.permute.xlu0 %768
      %770 = vrot.lane.b32.xlu0 %v761, 120
      %v771 = vpop.permute.xlu0 %770
      %772 = vrot.lane.b32.xlu0 %v762, 120
      %v773 = vpop.permute.xlu0 %772
      %774 = vrot.lane.b32.xlu0 %v763, 120
      %v775 = vpop.permute.xlu0 %774
      %vm780 = vcmask 15360
      %781 = vst.msk [vmem:[%s226] sm:$0xff] %vm780, %v769
      %782 = vst.msk [vmem:[%s226 + $0x8] sm:$0xff] %vm780, %v771
      %783 = vst.msk [vmem:[%s226 + $0x10] sm:$0xff] %vm780, %v773
      %784 = vst.msk [vmem:[%s226 + $0x18] sm:$0xff] %vm780, %v775
      %s785 = smul.u32 4, %s16
      %p786 = scmp.lt.s32.totalorder %s785, 7
      %s787 = scalar_select %p786, %s785, 7
      %s788 = smul.addr %s787, 8
      %s789 = scalar_lea.vmem %s5, %s788
      // Predicated region
      $region41: #{tpu_custom_call.1} parent=39 // pred_check
        %p790 = pneg %p144
      $region42: #{tpu_custom_call.1} parent=39 // pred_check_branch
        %792 = sbr.rel (%p790) target = $region44
      $region43: #{tpu_custom_call.1} parent=39 // pred_region
        %s793 = smul.u32 4, %s16
      $region44: #{tpu_custom_call.1} parent=39 // pred_fallthru
        _
    $region40: #{tpu_custom_call.1} parent=5 // pred_fallthru
      _
    %p794 = scmp.le.s32.totalorder 2, %s11
    // Predicated region
    $region45: #{tpu_custom_call.1} parent=5 // pred_check
      %p795 = pneg %p794
    $region46: #{tpu_custom_call.1} parent=5 // pred_check_branch
      %797 = sbr.rel (%p795) target = $region48
    $region47: #{tpu_custom_call.1} parent=5 // pred_region
      %s798 = ssub.s32 %s11, 2
      // Predicated region
      $region49: #{tpu_custom_call.1} parent=47 // pred_check
        %p799 = pneg %p150
      $region50: #{tpu_custom_call.1} parent=47 // pred_check_branch
        %801 = sbr.rel (%p799) target = $region52
      $region51: #{tpu_custom_call.1} parent=47 // pred_region
        %s802 = smul.u32 4, %s17
        %p803 = scmp.lt.s32.totalorder %s802, 7
        %s804 = scalar_select %p803, %s802, 7
        %s805 = smul.addr %s804, 8
        %s806 = scalar_lea.vmem %s5, %s805
      $region52: #{tpu_custom_call.1} parent=47 // pred_fallthru
        _
    $region48: #{tpu_custom_call.1} parent=5 // pred_fallthru
      _
  $region6: #{tpu_custom_call.1} parent=0 // loop_footer
    %s15 = sadd.s32 1, %s11
  $region7: #{tpu_custom_call.1} parent=0 // loop_footer_branch
    %10 = sbr.rel target = $region3
  $region8: #{tpu_custom_call.1} parent=0 // loop_exit
    _

</llo_original>
